<compile_context>
chip_gen: v5e
topology: v5e:2x2
jax: 0.10.0
libtpu: 0.0.40
codegen_flags: <defaults>
</compile_context>

<pallas_src>
import jax
import jax.numpy as jnp
from jax.experimental import pallas as pl
from jax.experimental.pallas import tpu as pltpu

_LANES = 128    # lane width: pad the tiny action dim of w2 up to this for the MXU
_TILE_B = 2048  # batch tile for the gridded path / cutoff for the gridless path


def _dqn_kernel(x_ref, w1_ref, b1_ref, w2_ref, b2_ref, o_ref):
    a = o_ref.shape[-1]                       # real number of actions
    # Layer 1: (B, D_in) @ (D_in, H) on the MXU; x cast to bf16 in-kernel
    # (saves a separate XLA cast op + HBM round trip per forward).
    x16 = x_ref[...].astype(jnp.bfloat16)
    h = jnp.dot(x16, w1_ref[...], preferred_element_type=jnp.float32)
    h = jnp.maximum(h + b1_ref[...], 0.0)     # bias + ReLU in f32 (VPU)
    # Layer 2: (B, H) @ (H, A_pad). w2 is lane-padded to 128 so the MXU output
    # columns are full; only the first `a` real columns are biased and stored
    # (masked 4-lane store -> tiny output HBM traffic, no wrapper slice).
    q = jnp.dot(h.astype(jnp.bfloat16), w2_ref[...],
                preferred_element_type=jnp.float32)
    o_ref[...] = (q[:, :a] + b2_ref[...]).astype(o_ref.dtype)


def init_params(key, input_size, nr_actions):
    """Deterministic init mimicking nn.Linear defaults: U(-1/sqrt(fan_in), +)."""
    hidden = input_size * 20
    k1, k2, k3, k4 = jax.random.split(key, 4)
    bound1 = 1.0 / jnp.sqrt(float(input_size))
    bound2 = 1.0 / jnp.sqrt(float(hidden))
    # Stored as [in, out] (transpose of PyTorch's [out, in]) for x @ W.
    w1 = jax.random.uniform(k1, (input_size, hidden), jnp.float32, -bound1, bound1)
    b1 = jax.random.uniform(k2, (1, hidden), jnp.float32, -bound1, bound1)
    w2 = jax.random.uniform(k3, (hidden, nr_actions), jnp.float32, -bound2, bound2)
    b2 = jax.random.uniform(k4, (1, nr_actions), jnp.float32, -bound2, bound2)
    return w1, b1, w2, b2


def prepare_params(w1, b1, w2, b2):
    """One-time parameter prep (call once, NOT per forward):

      * weights cast to bf16 (native MXU operand dtype),
      * w2's action dim zero-padded to a multiple of 128 lanes,
      * biases kept f32 (epilogue runs in f32 on the VPU; b2 stays unpadded).
    """
    A = w2.shape[1]
    A_pad = max(_LANES, pl.cdiv(A, _LANES) * _LANES)
    w2p = jnp.pad(w2, ((0, 0), (0, A_pad - A)))
    return (w1.astype(jnp.bfloat16),
            b1.reshape(1, -1).astype(jnp.float32),
            w2p.astype(jnp.bfloat16),
            b2.reshape(1, -1).astype(jnp.float32))


def dqn_forward(x, params):
    """Fused MLP forward: relu(x @ w1 + b1) @ w2 + b2.

    x: (B, D_in) f32.  params: output of `prepare_params`.
    Returns (B, nr_actions) f32 Q-values.  Exactly one XLA op per call.
    """
    w1, b1, w2p, b2 = params
    B, D_in = x.shape
    H = w1.shape[1]
    A_pad = w2p.shape[1]
    A = b2.shape[1]

    cost = pl.CostEstimate(
        flops=2 * B * (D_in * H + H * A_pad),
        transcendentals=0,
        bytes_accessed=(B * D_in * 4                 # x (f32 in)
                        + D_in * H * 2 + H * A_pad * 2   # bf16 weights
                        + H * 4 + A * 4              # f32 biases
                        + B * A * 4),                # f32 out
    )

    if B <= _TILE_B:
        # Small/medium batch (the RL per-step path): no grid at all -- single
        # invocation, every operand is a full-extent VMEM block (exempt from
        # the (8,128) divisibility rule).  No pre-casts, no post-slices.
        return pl.pallas_call(
            _dqn_kernel,
            out_shape=jax.ShapeDtypeStruct((B, A), jnp.float32),
            in_specs=[pl.BlockSpec(memory_space=pltpu.MemorySpace.VMEM)] * 5,
            out_specs=pl.BlockSpec(memory_space=pltpu.MemorySpace.VMEM),
            cost_estimate=cost,
        )(x, w1, b1, w2p, b2)

    # Large batch: tile the (unpadded) batch axis.  Weights/biases use constant
    # block indices so they are DMA'd once and stay VMEM-resident across tiles.
    # Since B > _TILE_B here, nb >= 2 always -> both v7x TensorCores get work
    # via the "parallel" axis.  The ragged final block is masked by Pallas.
    nb = pl.cdiv(B, _TILE_B)
    return pl.pallas_call(
        _dqn_kernel,
        out_shape=jax.ShapeDtypeStruct((B, A), jnp.float32),
        grid_spec=pltpu.PrefetchScalarGridSpec(
            num_scalar_prefetch=0,
            grid=(nb,),
            in_specs=[
                pl.BlockSpec((_TILE_B, D_in), lambda b: (b, 0)),  # x (f32)
                pl.BlockSpec((D_in, H), lambda b: (0, 0)),        # w1 (bf16)
                pl.BlockSpec((1, H), lambda b: (0, 0)),           # b1 (f32)
                pl.BlockSpec((H, A_pad), lambda b: (0, 0)),       # w2 (bf16, padded)
                pl.BlockSpec((1, A), lambda b: (0, 0)),           # b2 (f32)
            ],
            out_specs=pl.BlockSpec((_TILE_B, A), lambda b: (b, 0)),
        ),
        compiler_params=pltpu.CompilerParams(
            dimension_semantics=("parallel",),   # independent batch tiles
        ),
        cost_estimate=cost,
    )(x, w1, b1, w2p, b2)


def _ref_bf16(x, w1, b1, w2, b2):
    """Plain-JAX reference matching the kernel's bf16-operand / f32-accum math."""
    h = jnp.dot(x.astype(jnp.bfloat16), w1.astype(jnp.bfloat16),
                preferred_element_type=jnp.float32) + b1
    h = jnp.maximum(h, 0.0)
    return jnp.dot(h.astype(jnp.bfloat16), w2.astype(jnp.bfloat16),
                   preferred_element_type=jnp.float32) + b2


if __name__ == "__main__":
    # Small shapes consistent with the module: snake board state vector.
    input_size = 32          # -> hidden = 640
    nr_actions = 4

    key = jax.random.PRNGKey(0)
    kx, kp, kx2 = jax.random.split(key, 3)
    w1, b1, w2, b2 = init_params(kp, input_size, nr_actions)
    params = prepare_params(w1, b1, w2, b2)   # one-time prep, outside the forward

    # --- small-batch (gridless) path: the per-env-step inference case ---
    batch = 8
    x = jax.random.normal(kx, (batch, input_size), jnp.float32)
    out = jax.block_until_ready(dqn_forward(x, params))
    assert out.shape == (batch, nr_actions)
    ref16 = _ref_bf16(x, w1, b1, w2, b2)
    ref32 = jnp.maximum(x @ w1 + b1, 0.0) @ w2 + b2
    # NOTE: bf16 matmul operands deviate slightly from the f32 PyTorch model;
    # near-tie Q-values could flip the greedy action (acceptable for DQN).
    assert jnp.allclose(out, ref16, atol=2e-3, rtol=2e-3)
    assert jnp.allclose(out, ref32, atol=5e-2, rtol=5e-2)

    # --- batched (gridded) path: > _TILE_B rows, ragged final tile (nb = 2) ---
    batch2 = 2500
    x2 = jax.random.normal(kx2, (batch2, input_size), jnp.float32)
    out2 = jax.block_until_ready(dqn_forward(x2, params))
    assert out2.shape == (batch2, nr_actions)
    ref16_2 = _ref_bf16(x2, w1, b1, w2, b2)
    assert jnp.allclose(out2, ref16_2, atol=2e-3, rtol=2e-3)

    print("KERNEL_OK")
</pallas_src>

<mosaic_0001>
module attributes {stable_mosaic.version = 11 : i64} {
  func.func @_dqn_kernel(%arg0: memref<8x32xf32, #tpu.memory_space<vmem>>, %arg1: memref<32x640xbf16, #tpu.memory_space<vmem>>, %arg2: memref<1x640xf32, #tpu.memory_space<vmem>>, %arg3: memref<640x128xbf16, #tpu.memory_space<vmem>>, %arg4: memref<1x4xf32, #tpu.memory_space<vmem>>, %arg5: memref<8x4xf32, #tpu.memory_space<vmem>>) attributes {dimension_semantics = [], scalar_prefetch = 0 : i64, scratch_operands = 0 : i64, tpu.core_type = #tpu.core_type<tc>} {
    %c0 = arith.constant 0 : index
    %c0_0 = arith.constant 0 : index
    %0 = vector.load %arg0[%c0, %c0_0] : memref<8x32xf32, #tpu.memory_space<vmem>>, vector<8x32xf32>
    %1 = arith.truncf %0 : vector<8x32xf32> to vector<8x32xbf16>
    %c0_1 = arith.constant 0 : index
    %c0_2 = arith.constant 0 : index
    %2 = vector.load %arg1[%c0_1, %c0_2] : memref<32x640xbf16, #tpu.memory_space<vmem>>, vector<32x640xbf16>
    %cst = arith.constant dense<0.000000e+00> : vector<8x640xf32>
    %3 = tpu.matmul %1, %2, %cst {dimension_numbers = #tpu.dot_dimension_numbers<[1], [0], [0], [1], [0, 0, 1, 1], [], []>} : vector<8x32xbf16>, vector<32x640xbf16>, vector<8x640xf32> -> vector<8x640xf32>
    %c0_3 = arith.constant 0 : index
    %c0_4 = arith.constant 0 : index
    %4 = vector.load %arg2[%c0_3, %c0_4] : memref<1x640xf32, #tpu.memory_space<vmem>>, vector<1x640xf32>
    %5 = vector.broadcast %4 : vector<1x640xf32> to vector<8x640xf32>
    %6 = arith.addf %3, %5 : vector<8x640xf32>
    %cst_5 = arith.constant 0.000000e+00 : f32
    %7 = vector.broadcast %cst_5 : f32 to vector<8x640xf32>
    %8 = arith.maximumf %6, %7 : vector<8x640xf32>
    %9 = arith.truncf %8 : vector<8x640xf32> to vector<8x640xbf16>
    %c0_6 = arith.constant 0 : index
    %c0_7 = arith.constant 0 : index
    %10 = vector.load %arg3[%c0_6, %c0_7] : memref<640x128xbf16, #tpu.memory_space<vmem>>, vector<640x128xbf16>
    %cst_8 = arith.constant dense<0.000000e+00> : vector<8x128xf32>
    %11 = tpu.matmul %9, %10, %cst_8 {dimension_numbers = #tpu.dot_dimension_numbers<[1], [0], [0], [1], [0, 0, 1, 1], [], []>} : vector<8x640xbf16>, vector<640x128xbf16>, vector<8x128xf32> -> vector<8x128xf32>
    %12 = vector.extract_strided_slice %11 {offsets = [0, 0], sizes = [8, 4], strides = [1, 1]} : vector<8x128xf32> to vector<8x4xf32>
    %c0_9 = arith.constant 0 : index
    %c0_10 = arith.constant 0 : index
    %13 = vector.load %arg4[%c0_9, %c0_10] : memref<1x4xf32, #tpu.memory_space<vmem>>, vector<1x4xf32>
    %14 = vector.broadcast %13 : vector<1x4xf32> to vector<8x4xf32>
    %15 = arith.addf %12, %14 : vector<8x4xf32>
    %c0_11 = arith.constant 0 : index
    %c0_12 = arith.constant 0 : index
    %16 = vector.load %arg5[%c0_11, %c0_12] : memref<8x4xf32, #tpu.memory_space<vmem>>, vector<8x4xf32>
    tpu.vector_store %arg5[%c0_11, %c0_12], %15 {strides = array<i32>} : memref<8x4xf32, #tpu.memory_space<vmem>>, vector<8x4xf32>,
    return
  }
}

</mosaic_0001>

<llo_original>
// kernel: tpu_custom_call.1
$region0: #{tpu_custom_call.1}
  #allocation0 [shape = 'u32[]', space=smem, size = 0x4, offset = 0x4, fixed_abs, tag = 'smem constant byte address 0x4 - core index']
  #allocation1 [shape = 'u32[72,128]{1,0:T(1,128)}', space=vmem, size = 0x9000, scoped, tag = 'internal scratch']
  %s0 = inlined_call_operand.hbm [shape: f32[8,32], index: 0, kind: input, shape index: {}]
  %s1 = inlined_call_operand.hbm [shape: bf16[32,640], index: 1, kind: input, shape index: {}]
  %s2 = inlined_call_operand.hbm [shape: f32[1,640], index: 2, kind: input, shape index: {}]
  %s3 = inlined_call_operand.hbm [shape: bf16[640,128], index: 3, kind: input, shape index: {}]
  %s4 = inlined_call_operand.vmem [shape: f32[1,4], index: 4, kind: input, shape index: {}]
  %s5 = inlined_call_operand.vmem [shape: f32[8,4], index: 5, kind: output, shape index: {}]
  %s6 = sld [smem:[#allocation0]]
  $region46: #{tpu_custom_call.1} parent=0
    _
  %s8 = ssub.s32 1, %s6
  %s9 = scalar_select 0, %s8, %s6
  $region1: #{tpu_custom_call.1} parent=0
    #allocation2 [shape = 'u8[4096]{0}', space=vmem, size = 0x1000, scoped, tag = 'input window, operand 0, single buffered']
    #allocation3 [shape = 's32[1]{0}', space=sflag, size = 0x4, scoped, tag = 'scoped memory for tpu_custom_call.1']
    #allocation4 [shape = 'u8[40960]{0}', space=vmem, size = 0xa000, scoped, tag = 'input window, operand 1, single buffered']
    #allocation5 [shape = 's32[1]{0}', space=sflag, size = 0x4, scoped, tag = 'scoped memory for tpu_custom_call.1']
    #allocation6 [shape = 'u8[2560]{0}', space=vmem, size = 0xc00, scoped, tag = 'input window, operand 2, single buffered']
    #allocation7 [shape = 'u8[163840]{0}', space=vmem, size = 0x28000, scoped, tag = 'input window, operand 3, single buffered']
    #allocation8 [shape = 's32[1]{0}', space=sflag, size = 0x4, scoped, tag = 'scoped memory for tpu_custom_call.1']
    %10 = vsyncpa [#allocation3], 0
    %11 = vsyncpa [#allocation5], 0
    %12 = vsyncpa [#allocation8], 0
    // Predicated region
    $region2: #{tpu_custom_call.1} parent=1 // pred_check
      _
    $region3: #{tpu_custom_call.1} parent=1 // pred_check_branch
      %14 = sbr.rel (0) target = $region5
    $region4: #{tpu_custom_call.1} parent=1 // pred_region
      %16 = vsyncadd [#allocation3], 0
      %s18 = sshll.u32 %s0, 4
      %s19 = int_to_ptr.hbm [resolvable:$true] %s18
      %s20 = sshll.u32 [#allocation2], 4
      %s21 = int_to_ptr.vmem [resolvable:$true] %s20
      %23 = dma.hbm_to_vmem [thread:$0]  %s19, 128, %s21, [#allocation3]
    $region5: #{tpu_custom_call.1} parent=1 // pred_fallthru
      _
    // Predicated region
    $region6: #{tpu_custom_call.1} parent=1 // pred_check
      _
    $region7: #{tpu_custom_call.1} parent=1 // pred_check_branch
      %25 = sbr.rel (0) target = $region9
    $region8: #{tpu_custom_call.1} parent=1 // pred_region
      %27 = vsyncadd [#allocation5], 0
      %s28 = sshll.u32 %s1, 4
      %s29 = int_to_ptr.hbm [resolvable:$true] %s28
      %s30 = sshll.u32 [#allocation4], 4
      %s31 = int_to_ptr.vmem [resolvable:$true] %s30
      %36 = dma.hbm_to_vmem [thread:$0]  %s29, 1280, %s31, [#allocation5], 320, 320, 20
    $region9: #{tpu_custom_call.1} parent=1 // pred_fallthru
      _
    // Predicated region
    $region10: #{tpu_custom_call.1} parent=1 // pred_check
      _
    $region11: #{tpu_custom_call.1} parent=1 // pred_check_branch
      %38 = sbr.rel (0) target = $region13
    $region12: #{tpu_custom_call.1} parent=1 // pred_region
      %40 = vsyncadd [#allocation5], 0
      %s42 = sshll.u32 %s2, 4
      %s43 = int_to_ptr.hbm [resolvable:$true] %s42
      %s44 = sshll.u32 [#allocation6], 4
      %s45 = int_to_ptr.vmem [resolvable:$true] %s44
      %47 = dma.hbm_to_vmem [thread:$0]  %s43, 80, %s45, [#allocation5]
    $region13: #{tpu_custom_call.1} parent=1 // pred_fallthru
      _
    // Predicated region
    $region14: #{tpu_custom_call.1} parent=1 // pred_check
      _
    $region15: #{tpu_custom_call.1} parent=1 // pred_check_branch
      %49 = sbr.rel (0) target = $region17
    $region16: #{tpu_custom_call.1} parent=1 // pred_region
      %51 = vsyncadd [#allocation8], 0
      %s52 = sshll.u32 %s3, 4
      %s53 = int_to_ptr.hbm [resolvable:$true] %s52
      %s54 = sshll.u32 [#allocation7], 4
      %s55 = int_to_ptr.vmem [resolvable:$true] %s54
      %60 = dma.hbm_to_vmem [thread:$0]  %s53, 5120, %s55, [#allocation8], 64, 64, 4
    $region17: #{tpu_custom_call.1} parent=1 // pred_fallthru
      _
    // Predicated region
    $region18: #{tpu_custom_call.1} parent=1 // pred_check
      _
    $region19: #{tpu_custom_call.1} parent=1 // pred_check_branch
      %62 = sbr.rel (0) target = $region21
    $region20: #{tpu_custom_call.1} parent=1 // pred_region
      _
    $region21: #{tpu_custom_call.1} parent=1 // pred_fallthru
      _
    // Predicated region
    $region22: #{tpu_custom_call.1} parent=1 // pred_check
      _
    $region23: #{tpu_custom_call.1} parent=1 // pred_check_branch
      %64 = sbr.rel (0) target = $region25
    $region24: #{tpu_custom_call.1} parent=1 // pred_region
      %66 = dma.done [#allocation3], 128
    $region25: #{tpu_custom_call.1} parent=1 // pred_fallthru
      _
    // Predicated region
    $region26: #{tpu_custom_call.1} parent=1 // pred_check
      _
    $region27: #{tpu_custom_call.1} parent=1 // pred_check_branch
      %68 = sbr.rel (0) target = $region29
    $region28: #{tpu_custom_call.1} parent=1 // pred_region
      %70 = dma.done [#allocation5], 1280
    $region29: #{tpu_custom_call.1} parent=1 // pred_fallthru
      _
    // Predicated region
    $region30: #{tpu_custom_call.1} parent=1 // pred_check
      _
    $region31: #{tpu_custom_call.1} parent=1 // pred_check_branch
      %72 = sbr.rel (0) target = $region33
    $region32: #{tpu_custom_call.1} parent=1 // pred_region
      %74 = dma.done [#allocation5], 80
    $region33: #{tpu_custom_call.1} parent=1 // pred_fallthru
      _
    // Predicated region
    $region34: #{tpu_custom_call.1} parent=1 // pred_check
      _
    $region35: #{tpu_custom_call.1} parent=1 // pred_check_branch
      %76 = sbr.rel (0) target = $region37
    $region36: #{tpu_custom_call.1} parent=1 // pred_region
      %78 = dma.done [#allocation8], 5120
    $region37: #{tpu_custom_call.1} parent=1 // pred_fallthru
      _
    %v80 = vld [vmem:[#allocation2] sm:$0xff]
    %v81 = vpack.c.bf16 %v80, %v80
    %v82 = vld [vmem:[#allocation4] sm:$0xff]
    %v83 = vld [vmem:[#allocation4 + $0x8] sm:$0xff]
    %v84 = vld [vmem:[#allocation4 + $0x10] sm:$0xf]
    %v85 = vld [vmem:[#allocation4 + $0x14] sm:$0xff]
    %v86 = vld [vmem:[#allocation4 + $0x1c] sm:$0xff]
    %v87 = vld [vmem:[#allocation4 + $0x24] sm:$0xf]
    %v88 = vld [vmem:[#allocation4 + $0x28] sm:$0xff]
    %v89 = vld [vmem:[#allocation4 + $0x30] sm:$0xff]
    %v90 = vld [vmem:[#allocation4 + $0x38] sm:$0xf]
    %v91 = vld [vmem:[#allocation4 + $0x3c] sm:$0xff]
    %v92 = vld [vmem:[#allocation4 + $0x44] sm:$0xff]
    %v93 = vld [vmem:[#allocation4 + $0x4c] sm:$0xf]
    %v94 = vld [vmem:[#allocation6] sm:$0x1f]
    %v96 = vperm.slane %v94, 0
    %v97 = vperm.slane %v94, 1
    %v98 = vperm.slane %v94, 2
    %v99 = vperm.slane %v94, 3
    %v100 = vperm.slane %v94, 4
    %v118 = vunpack.c.l.b16 %v82
    %v119 = vunpack.c.h.b16 %v82
    %v120 = vunpack.c.l.b16 %v83
    %v121 = vunpack.c.h.b16 %v83
    %v122 = vunpack.c.l.b16 %v84
    %v123 = vunpack.c.l.b16 %v85
    %v124 = vunpack.c.h.b16 %v85
    %v125 = vunpack.c.l.b16 %v86
    %v126 = vunpack.c.h.b16 %v86
    %v127 = vunpack.c.l.b16 %v87
    %v128 = vunpack.c.l.b16 %v88
    %v129 = vunpack.c.h.b16 %v88
    %v130 = vunpack.c.l.b16 %v89
    %v131 = vunpack.c.h.b16 %v89
    %v132 = vunpack.c.l.b16 %v90
    %v133 = vunpack.c.l.b16 %v91
    %v134 = vunpack.c.h.b16 %v91
    %v135 = vunpack.c.l.b16 %v92
    %v136 = vunpack.c.h.b16 %v92
    %v137 = vunpack.c.l.b16 %v93
    %v138 = vpack.c.b16 %v123, %v118
    %v139 = vpack.c.b16 %v124, %v119
    %v140 = vpack.c.b16 %v125, %v120
    %v141 = vpack.c.b16 %v126, %v121
    %v142 = vpack.c.b16 %v127, %v122
    %v143 = vpack.c.b16 %v133, %v128
    %v144 = vpack.c.b16 %v134, %v129
    %v145 = vpack.c.b16 %v135, %v130
    %v146 = vpack.c.b16 %v136, %v131
    %v147 = vpack.c.b16 %v137, %v132
    %vm158 = vcmask 261120
    %v160 = vsel %vm158, %v81, 0
    %162 = vmatpush.bf16.msra.mxu0 0
    %163 = vmatpush.bf16.msra.mxu0 0
    %164 = vmatpush.bf16.msra.mxu0 0
    %165 = vmatpush.bf16.msra.mxu0 0
    %166 = vmatpush.bf16.msra.mxu0 0
    %167 = vmatpush.bf16.msra.mxu0 0
    %168 = vmatpush.bf16.msra.mxu0 %v143
    %169 = vmatpush.bf16.msra.mxu0 %v138
    %170 = vmatmul.bf16.gmra.mxu0 %v160
    %v171 = vpop.f32.mrf.mxu0
    %v172 = vadd.f32 %v96, %v171
    %v173 = vpop.f32.mrf.mxu0
    %174 = vdwg.mxu0
    %175 = vmatpush.bf16.msra.mxu0 0
    %176 = vmatpush.bf16.msra.mxu0 0
    %177 = vmatpush.bf16.msra.mxu0 0
    %178 = vmatpush.bf16.msra.mxu0 0
    %179 = vmatpush.bf16.msra.mxu0 0
    %180 = vmatpush.bf16.msra.mxu0 0
    %181 = vmatpush.bf16.msra.mxu0 %v144
    %182 = vmatpush.bf16.msra.mxu0 %v139
    %183 = vmatmul.bf16.gmra.mxu0 %v160
    %v184 = vpop.f32.mrf.mxu0
    %v185 = vadd.f32 %v97, %v184
    %v186 = vpop.f32.mrf.mxu0
    %187 = vdwg.mxu0
    %188 = vmatpush.bf16.msra.mxu0 0
    %189 = vmatpush.bf16.msra.mxu0 0
    %190 = vmatpush.bf16.msra.mxu0 0
    %191 = vmatpush.bf16.msra.mxu0 0
    %192 = vmatpush.bf16.msra.mxu0 0
    %193 = vmatpush.bf16.msra.mxu0 0
    %194 = vmatpush.bf16.msra.mxu0 %v145
    %195 = vmatpush.bf16.msra.mxu0 %v140
    %196 = vmatmul.bf16.gmra.mxu0 %v160
    %v197 = vpop.f32.mrf.mxu0
    %v198 = vadd.f32 %v98, %v197
    %v199 = vpop.f32.mrf.mxu0
    %200 = vdwg.mxu0
    %201 = vmatpush.bf16.msra.mxu0 0
    %202 = vmatpush.bf16.msra.mxu0 0
    %203 = vmatpush.bf16.msra.mxu0 0
    %204 = vmatpush.bf16.msra.mxu0 0
    %205 = vmatpush.bf16.msra.mxu0 0
    %206 = vmatpush.bf16.msra.mxu0 0
    %207 = vmatpush.bf16.msra.mxu0 %v146
    %208 = vmatpush.bf16.msra.mxu0 %v141
    %209 = vmatmul.bf16.gmra.mxu0 %v160
    %v210 = vpop.f32.mrf.mxu0
    %v211 = vadd.f32 %v99, %v210
    %v212 = vpop.f32.mrf.mxu0
    %213 = vdwg.mxu0
    %214 = vmatpush.bf16.msra.mxu0 0
    %215 = vmatpush.bf16.msra.mxu0 0
    %216 = vmatpush.bf16.msra.mxu0 0
    %217 = vmatpush.bf16.msra.mxu0 0
    %218 = vmatpush.bf16.msra.mxu0 0
    %219 = vmatpush.bf16.msra.mxu0 0
    %220 = vmatpush.bf16.msra.mxu0 %v147
    %221 = vmatpush.bf16.msra.mxu0 %v142
    %222 = vmatmul.bf16.gmra.mxu0 %v160
    %v223 = vpop.f32.mrf.mxu0
    %v224 = vadd.f32 %v100, %v223
    %v225 = vpop.f32.mrf.mxu0
    %226 = vdwg.mxu0
    %v227 = vmax.f32 %v172, 0.0
    %v228 = vmax.f32 %v185, 0.0
    %v229 = vmax.f32 %v198, 0.0
    %v230 = vmax.f32 %v211, 0.0
    %v231 = vmax.f32 %v224, 0.0
    %v232 = vpack.c.bf16 %v227, %v227
    %v233 = vpack.c.bf16 %v228, %v228
    %v234 = vpack.c.bf16 %v229, %v229
    %v235 = vpack.c.bf16 %v230, %v230
    %v236 = vpack.c.bf16 %v231, %v231
    %v237 = vld [vmem:[#allocation7] sm:$0xf]
    %v238 = vld [vmem:[#allocation7 + $0x4] sm:$0xf]
    %v239 = vld [vmem:[#allocation7 + $0x8] sm:$0xf]
    %v240 = vld [vmem:[#allocation7 + $0xc] sm:$0xf]
    %v241 = vld [vmem:[#allocation7 + $0x10] sm:$0xf]
    %v242 = vld [vmem:[#allocation7 + $0x14] sm:$0xf]
    %v243 = vld [vmem:[#allocation7 + $0x18] sm:$0xf]
    %v244 = vld [vmem:[#allocation7 + $0x1c] sm:$0xf]
    %v245 = vld [vmem:[#allocation7 + $0x20] sm:$0xf]
    %v246 = vld [vmem:[#allocation7 + $0x24] sm:$0xf]
    %v247 = vld [vmem:[#allocation7 + $0x28] sm:$0xf]
    %v248 = vld [vmem:[#allocation7 + $0x2c] sm:$0xf]
    %v249 = vld [vmem:[#allocation7 + $0x30] sm:$0xf]
    %v250 = vld [vmem:[#allocation7 + $0x34] sm:$0xf]
    %v251 = vld [vmem:[#allocation7 + $0x38] sm:$0xf]
    %v252 = vld [vmem:[#allocation7 + $0x3c] sm:$0xf]
    %v253 = vld [vmem:[#allocation7 + $0x40] sm:$0xf]
    %v254 = vld [vmem:[#allocation7 + $0x44] sm:$0xf]
    %v255 = vld [vmem:[#allocation7 + $0x48] sm:$0xf]
    %v256 = vld [vmem:[#allocation7 + $0x4c] sm:$0xf]
    %v257 = vld [vmem:[#allocation7 + $0x50] sm:$0xf]
    %v258 = vld [vmem:[#allocation7 + $0x54] sm:$0xf]
    %v259 = vld [vmem:[#allocation7 + $0x58] sm:$0xf]
    %v260 = vld [vmem:[#allocation7 + $0x5c] sm:$0xf]
    %v261 = vld [vmem:[#allocation7 + $0x60] sm:$0xf]
    %v262 = vld [vmem:[#allocation7 + $0x64] sm:$0xf]
    %v263 = vld [vmem:[#allocation7 + $0x68] sm:$0xf]
    %v264 = vld [vmem:[#allocation7 + $0x6c] sm:$0xf]
    %v265 = vld [vmem:[#allocation7 + $0x70] sm:$0xf]
    %v266 = vld [vmem:[#allocation7 + $0x74] sm:$0xf]
    %v267 = vld [vmem:[#allocation7 + $0x78] sm:$0xf]
    %v268 = vld [vmem:[#allocation7 + $0x7c] sm:$0xf]
    %v269 = vld [vmem:[#allocation7 + $0x80] sm:$0xf]
    %v270 = vld [vmem:[#allocation7 + $0x84] sm:$0xf]
    %v271 = vld [vmem:[#allocation7 + $0x88] sm:$0xf]
    %v272 = vld [vmem:[#allocation7 + $0x8c] sm:$0xf]
    %v273 = vld [vmem:[#allocation7 + $0x90] sm:$0xf]
    %v274 = vld [vmem:[#allocation7 + $0x94] sm:$0xf]
    %v275 = vld [vmem:[#allocation7 + $0x98] sm:$0xf]
    %v276 = vld [vmem:[#allocation7 + $0x9c] sm:$0xf]
    %v277 = vld [vmem:[#allocation7 + $0xa0] sm:$0xf]
    %v278 = vld [vmem:[#allocation7 + $0xa4] sm:$0xf]
    %v279 = vld [vmem:[#allocation7 + $0xa8] sm:$0xf]
    %v280 = vld [vmem:[#allocation7 + $0xac] sm:$0xf]
    %v281 = vld [vmem:[#allocation7 + $0xb0] sm:$0xf]
    %v282 = vld [vmem:[#allocation7 + $0xb4] sm:$0xf]
    %v283 = vld [vmem:[#allocation7 + $0xb8] sm:$0xf]
    %v284 = vld [vmem:[#allocation7 + $0xbc] sm:$0xf]
    %v285 = vld [vmem:[#allocation7 + $0xc0] sm:$0xf]
    %v286 = vld [vmem:[#allocation7 + $0xc4] sm:$0xf]
    %v287 = vld [vmem:[#allocation7 + $0xc8] sm:$0xf]
    %v288 = vld [vmem:[#allocation7 + $0xcc] sm:$0xf]
    %v289 = vld [vmem:[#allocation7 + $0xd0] sm:$0xf]
    %v290 = vld [vmem:[#allocation7 + $0xd4] sm:$0xf]
    %v291 = vld [vmem:[#allocation7 + $0xd8] sm:$0xf]
    %v292 = vld [vmem:[#allocation7 + $0xdc] sm:$0xf]
    %v293 = vld [vmem:[#allocation7 + $0xe0] sm:$0xf]
    %v294 = vld [vmem:[#allocation7 + $0xe4] sm:$0xf]
    %v295 = vld [vmem:[#allocation7 + $0xe8] sm:$0xf]
    %v296 = vld [vmem:[#allocation7 + $0xec] sm:$0xf]
    %v297 = vld [vmem:[#allocation7 + $0xf0] sm:$0xf]
    %v298 = vld [vmem:[#allocation7 + $0xf4] sm:$0xf]
    %v299 = vld [vmem:[#allocation7 + $0xf8] sm:$0xf]
    %v300 = vld [vmem:[#allocation7 + $0xfc] sm:$0xf]
    %v301 = vld [vmem:[#allocation7 + $0x100] sm:$0xf]
    %v302 = vld [vmem:[#allocation7 + $0x104] sm:$0xf]
    %v303 = vld [vmem:[#allocation7 + $0x108] sm:$0xf]
    %v304 = vld [vmem:[#allocation7 + $0x10c] sm:$0xf]
    %v305 = vld [vmem:[#allocation7 + $0x110] sm:$0xf]
    %v306 = vld [vmem:[#allocation7 + $0x114] sm:$0xf]
    %v307 = vld [vmem:[#allocation7 + $0x118] sm:$0xf]
    %v308 = vld [vmem:[#allocation7 + $0x11c] sm:$0xf]
    %v309 = vld [vmem:[#allocation7 + $0x120] sm:$0xf]
    %v310 = vld [vmem:[#allocation7 + $0x124] sm:$0xf]
    %v311 = vld [vmem:[#allocation7 + $0x128] sm:$0xf]
    %v312 = vld [vmem:[#allocation7 + $0x12c] sm:$0xf]
    %v313 = vld [vmem:[#allocation7 + $0x130] sm:$0xf]
    %v314 = vld [vmem:[#allocation7 + $0x134] sm:$0xf]
    %v315 = vld [vmem:[#allocation7 + $0x138] sm:$0xf]
    %v316 = vld [vmem:[#allocation7 + $0x13c] sm:$0xf]
    %v397 = vunpack.c.l.b16 %v237
    %v398 = vunpack.c.l.b16 %v238
    %v399 = vunpack.c.l.b16 %v239
    %v400 = vunpack.c.l.b16 %v240
    %v401 = vunpack.c.l.b16 %v241
    %v402 = vunpack.c.l.b16 %v242
    %v403 = vunpack.c.l.b16 %v243
    %v404 = vunpack.c.l.b16 %v244
    %v405 = vunpack.c.l.b16 %v245
    %v406 = vunpack.c.l.b16 %v246
    %v407 = vunpack.c.l.b16 %v247
    %v408 = vunpack.c.l.b16 %v248
    %v409 = vunpack.c.l.b16 %v249
    %v410 = vunpack.c.l.b16 %v250
    %v411 = vunpack.c.l.b16 %v251
    %v412 = vunpack.c.l.b16 %v252
    %v413 = vunpack.c.l.b16 %v253
    %v414 = vunpack.c.l.b16 %v254
    %v415 = vunpack.c.l.b16 %v255
    %v416 = vunpack.c.l.b16 %v256
    %v417 = vunpack.c.l.b16 %v257
    %v418 = vunpack.c.l.b16 %v258
    %v419 = vunpack.c.l.b16 %v259
    %v420 = vunpack.c.l.b16 %v260
    %v421 = vunpack.c.l.b16 %v261
    %v422 = vunpack.c.l.b16 %v262
    %v423 = vunpack.c.l.b16 %v263
    %v424 = vunpack.c.l.b16 %v264
    %v425 = vunpack.c.l.b16 %v265
    %v426 = vunpack.c.l.b16 %v266
    %v427 = vunpack.c.l.b16 %v267
    %v428 = vunpack.c.l.b16 %v268
    %v429 = vunpack.c.l.b16 %v269
    %v430 = vunpack.c.l.b16 %v270
    %v431 = vunpack.c.l.b16 %v271
    %v432 = vunpack.c.l.b16 %v272
    %v433 = vunpack.c.l.b16 %v273
    %v434 = vunpack.c.l.b16 %v274
    %v435 = vunpack.c.l.b16 %v275
    %v436 = vunpack.c.l.b16 %v276
    %v437 = vunpack.c.l.b16 %v277
    %v438 = vunpack.c.l.b16 %v278
    %v439 = vunpack.c.l.b16 %v279
    %v440 = vunpack.c.l.b16 %v280
    %v441 = vunpack.c.l.b16 %v281
    %v442 = vunpack.c.l.b16 %v282
    %v443 = vunpack.c.l.b16 %v283
    %v444 = vunpack.c.l.b16 %v284
    %v445 = vunpack.c.l.b16 %v285
    %v446 = vunpack.c.l.b16 %v286
    %v447 = vunpack.c.l.b16 %v287
    %v448 = vunpack.c.l.b16 %v288
    %v449 = vunpack.c.l.b16 %v289
    %v450 = vunpack.c.l.b16 %v290
    %v451 = vunpack.c.l.b16 %v291
    %v452 = vunpack.c.l.b16 %v292
    %v453 = vunpack.c.l.b16 %v293
    %v454 = vunpack.c.l.b16 %v294
    %v455 = vunpack.c.l.b16 %v295
    %v456 = vunpack.c.l.b16 %v296
    %v457 = vunpack.c.l.b16 %v297
    %v458 = vunpack.c.l.b16 %v298
    %v459 = vunpack.c.l.b16 %v299
    %v460 = vunpack.c.l.b16 %v300
    %v461 = vunpack.c.l.b16 %v301
    %v462 = vunpack.c.l.b16 %v302
    %v463 = vunpack.c.l.b16 %v303
    %v464 = vunpack.c.l.b16 %v304
    %v465 = vunpack.c.l.b16 %v305
    %v466 = vunpack.c.l.b16 %v306
    %v467 = vunpack.c.l.b16 %v307
    %v468 = vunpack.c.l.b16 %v308
    %v469 = vunpack.c.l.b16 %v309
    %v470 = vunpack.c.l.b16 %v310
    %v471 = vunpack.c.l.b16 %v311
    %v472 = vunpack.c.l.b16 %v312
    %v473 = vunpack.c.l.b16 %v313
    %v474 = vunpack.c.l.b16 %v314
    %v475 = vunpack.c.l.b16 %v315
    %v476 = vunpack.c.l.b16 %v316
    %v477 = vpack.c.b16 %v398, %v397
    %v478 = vpack.c.b16 %v400, %v399
    %v479 = vpack.c.b16 %v402, %v401
    %v480 = vpack.c.b16 %v404, %v403
    %v481 = vpack.c.b16 %v406, %v405
    %v482 = vpack.c.b16 %v408, %v407
    %v483 = vpack.c.b16 %v410, %v409
    %v484 = vpack.c.b16 %v412, %v411
    %v485 = vpack.c.b16 %v414, %v413
    %v486 = vpack.c.b16 %v416, %v415
    %v487 = vpack.c.b16 %v418, %v417
    %v488 = vpack.c.b16 %v420, %v419
    %v489 = vpack.c.b16 %v422, %v421
    %v490 = vpack.c.b16 %v424, %v423
    %v491 = vpack.c.b16 %v426, %v425
    %v492 = vpack.c.b16 %v428, %v427
    %v493 = vpack.c.b16 %v430, %v429
    %v494 = vpack.c.b16 %v432, %v431
    %v495 = vpack.c.b16 %v434, %v433
    %v496 = vpack.c.b16 %v436, %v435
    %v497 = vpack.c.b16 %v438, %v437
    %v498 = vpack.c.b16 %v440, %v439
    %v499 = vpack.c.b16 %v442, %v441
    %v500 = vpack.c.b16 %v444, %v443
    %v501 = vpack.c.b16 %v446, %v445
    %v502 = vpack.c.b16 %v448, %v447
    %v503 = vpack.c.b16 %v450, %v449
    %v504 = vpack.c.b16 %v452, %v451
    %v505 = vpack.c.b16 %v454, %v453
    %v506 = vpack.c.b16 %v456, %v455
    %v507 = vpack.c.b16 %v458, %v457
    %v508 = vpack.c.b16 %v460, %v459
    %v509 = vpack.c.b16 %v462, %v461
    %v510 = vpack.c.b16 %v464, %v463
    %v511 = vpack.c.b16 %v466, %v465
    %v512 = vpack.c.b16 %v468, %v467
    %v513 = vpack.c.b16 %v470, %v469
    %v514 = vpack.c.b16 %v472, %v471
    %v515 = vpack.c.b16 %v474, %v473
    %v516 = vpack.c.b16 %v476, %v475
    %557 = vmatpush.bf16.msra.mxu0 %v484
    %558 = vmatpush.bf16.msra.mxu0 %v483
    %559 = vmatpush.bf16.msra.mxu0 %v482
    %560 = vmatpush.bf16.msra.mxu0 %v481
    %561 = vmatpush.bf16.msra.mxu0 %v480
    %562 = vmatpush.bf16.msra.mxu0 %v479
    %563 = vmatpush.bf16.msra.mxu0 %v478
    %564 = vmatpush.bf16.msra.mxu0 %v477
    %565 = vmatmul.bf16.gmra.mxu0 %v232
    %v566 = vpop.f32.mrf.mxu0
    %v567 = vadd.f32 0.0, %v566
    %v568 = vpop.f32.mrf.mxu0
    %569 = vdwg.mxu0
    %570 = vmatpush.bf16.msra.mxu0 %v492
    %571 = vmatpush.bf16.msra.mxu0 %v491
    %572 = vmatpush.bf16.msra.mxu0 %v490
    %573 = vmatpush.bf16.msra.mxu0 %v489
    %574 = vmatpush.bf16.msra.mxu0 %v488
    %575 = vmatpush.bf16.msra.mxu0 %v487
    %576 = vmatpush.bf16.msra.mxu0 %v486
    %577 = vmatpush.bf16.msra.mxu0 %v485
    %578 = vmatmul.bf16.gmra.mxu0 %v233
    %v579 = vpop.f32.mrf.mxu0
    %v580 = vadd.f32 %v567, %v579
    %v581 = vpop.f32.mrf.mxu0
    %582 = vdwg.mxu0
    %583 = vmatpush.bf16.msra.mxu0 %v500
    %584 = vmatpush.bf16.msra.mxu0 %v499
    %585 = vmatpush.bf16.msra.mxu0 %v498
    %586 = vmatpush.bf16.msra.mxu0 %v497
    %587 = vmatpush.bf16.msra.mxu0 %v496
    %588 = vmatpush.bf16.msra.mxu0 %v495
    %589 = vmatpush.bf16.msra.mxu0 %v494
    %590 = vmatpush.bf16.msra.mxu0 %v493
    %591 = vmatmul.bf16.gmra.mxu0 %v234
    %v592 = vpop.f32.mrf.mxu0
    %v593 = vadd.f32 %v580, %v592
    %v594 = vpop.f32.mrf.mxu0
    %595 = vdwg.mxu0
    %596 = vmatpush.bf16.msra.mxu0 %v508
    %597 = vmatpush.bf16.msra.mxu0 %v507
    %598 = vmatpush.bf16.msra.mxu0 %v506
    %599 = vmatpush.bf16.msra.mxu0 %v505
    %600 = vmatpush.bf16.msra.mxu0 %v504
    %601 = vmatpush.bf16.msra.mxu0 %v503
    %602 = vmatpush.bf16.msra.mxu0 %v502
    %603 = vmatpush.bf16.msra.mxu0 %v501
    %604 = vmatmul.bf16.gmra.mxu0 %v235
    %v605 = vpop.f32.mrf.mxu0
    %v606 = vadd.f32 %v593, %v605
    %v607 = vpop.f32.mrf.mxu0
    %608 = vdwg.mxu0
    %609 = vmatpush.bf16.msra.mxu0 %v516
    %610 = vmatpush.bf16.msra.mxu0 %v515
    %611 = vmatpush.bf16.msra.mxu0 %v514
    %612 = vmatpush.bf16.msra.mxu0 %v513
    %613 = vmatpush.bf16.msra.mxu0 %v512
    %614 = vmatpush.bf16.msra.mxu0 %v511
    %615 = vmatpush.bf16.msra.mxu0 %v510
    %616 = vmatpush.bf16.msra.mxu0 %v509
    %617 = vmatmul.bf16.gmra.mxu0 %v236
    %v618 = vpop.f32.mrf.mxu0
    %v619 = vadd.f32 %v606, %v618
    %v620 = vpop.f32.mrf.mxu0
    %621 = vdwg.mxu0
    %v622 = vld [vmem:[%s4] sm:$0x1]
    %v624 = vperm.slane %v622, 0
    %v626 = vadd.f32 %v619, %v624
    %vm627 = vcmask 31744
    %628 = vst.msk [vmem:[%s5] sm:$0xff] %vm627, %v626
    // Predicated region
    $region38: #{tpu_custom_call.1} parent=1 // pred_check
      _
    $region39: #{tpu_custom_call.1} parent=1 // pred_check_branch
      %630 = sbr.rel (0) target = $region41
    $region40: #{tpu_custom_call.1} parent=1 // pred_region
      _
    $region41: #{tpu_custom_call.1} parent=1 // pred_fallthru
      _
    // Predicated region
    $region42: #{tpu_custom_call.1} parent=1 // pred_check
      _
    $region43: #{tpu_custom_call.1} parent=1 // pred_check_branch
      %632 = sbr.rel (0) target = $region45
    $region44: #{tpu_custom_call.1} parent=1 // pred_region
      _
    $region45: #{tpu_custom_call.1} parent=1 // pred_fallthru
      _
    %633 = vsyncpa [#allocation3], 1
    %634 = vsyncpa [#allocation5], 1
    %635 = vsyncpa [#allocation8], 1

</llo_original>
